<compile_context>
chip_gen: v6e
topology: v6e:2x2x1
jax: 0.10.0
libtpu: 0.0.40
codegen_flags: <defaults>
</compile_context>

<pallas_src>
import jax
import jax.numpy as jnp
from jax.experimental import pallas as pl
from jax.experimental.pallas import tpu as pltpu


def _mv_kernel(a_ref, x_ref, o_ref):
    # a_ref: (TILE_M, K) in A's native dtype; x_ref: (1, K); o_ref: (TILE_M, 1)
    a = a_ref[...].astype(jnp.float32)          # in-kernel cast: free VPU work under the DMA
    x = x_ref[...].astype(jnp.float32)          # (1, K) sublane-broadcast over rows
    o_ref[...] = jnp.sum(a * x, axis=1, keepdims=True).astype(o_ref.dtype)


def mv_pallas(A, x, *, tile_m=4096):
    """y = A @ x  (torch.mv).  A: (M, K), x: (K,) -> (M,)."""
    M, K = A.shape
    assert x.shape == (K,), (x.shape, K)

    # ~8 MiB of f32-equivalent A per pipeline buffer: double-buffered A plus the
    # in-kernel f32 temporaries stay under the explicit 32 MiB VMEM limit on
    # every generation, while per-step DMA time dwarfs the ~0.35 us step cost.
    per_buffer_bytes = 8 * 1024 * 1024
    rows_fit = max(8, (per_buffer_bytes // (4 * K)) // 8 * 8)
    tile = min(tile_m, rows_fit)                # multiple of 8
    if M <= tile:
        tile = M                                # full-extent block (always legal), grid of 1

    out_dtype = jnp.result_type(A.dtype, x.dtype)
    x2 = x.reshape(1, K)                        # lane-major copy of the tiny parameter vector

    y = pl.pallas_call(
        _mv_kernel,
        out_shape=jax.ShapeDtypeStruct((M, 1), out_dtype),
        grid=(pl.cdiv(M, tile),),
        in_specs=[
            # Row tiles of A, native dtype, K = full extent (no padding copy).
            pl.BlockSpec((tile, K), lambda i: (i, 0)),
            # x: constant block index -> DMA'd once, resident in VMEM.
            pl.BlockSpec((1, K), lambda i: (0, 0)),
        ],
        out_specs=pl.BlockSpec((tile, 1), lambda i: (i, 0)),
        compiler_params=pltpu.CompilerParams(
            dimension_semantics=("parallel",),          # megacore sharding on v7x
            vmem_limit_bytes=32 * 1024 * 1024,          # safe on v5e/v6e/v7x
        ),
    )(A, x2)
    return y[:, 0]


# --- module-like API ---------------------------------------------------------
def init_linear_least_squares(input_dim, dtype=jnp.float32):
    # nn.Parameter(torch.zeros(input_dim))
    return {"x": jnp.zeros((input_dim,), dtype)}


def linear_least_squares_forward(params, A):
    return mv_pallas(A, params["x"])


# -----------------------------------------------------------------------------
if __name__ == "__main__":
    INPUT_DIM = 256   # columns of A == len(x)
    NUM_ROWS = 512    # rows of A

    key = jax.random.PRNGKey(0)
    k_a, k_x, k_a2, k_a3 = jax.random.split(key, 4)

    A = jax.random.normal(k_a, (NUM_ROWS, INPUT_DIM), jnp.float32)
    fwd = jax.jit(linear_least_squares_forward)

    # 1) Module exactly as constructed: x = zeros  ->  forward(A) == 0.
    params = init_linear_least_squares(INPUT_DIM)
    y0 = fwd(params, A)
    jax.block_until_ready(y0)
    assert y0.shape == (NUM_ROWS,), y0.shape
    assert bool(jnp.all(y0 == 0.0))

    # 2) Non-trivial parameter values (as after training) vs. plain-JAX reference.
    params_trained = {"x": jax.random.normal(k_x, (INPUT_DIM,), jnp.float32)}
    y1 = fwd(params_trained, A)
    ref1 = jnp.dot(A, params_trained["x"], precision=jax.lax.Precision.HIGHEST)
    jax.block_until_ready(y1)
    assert y1.shape == (NUM_ROWS,)
    assert bool(jnp.allclose(y1, ref1, atol=1e-3, rtol=1e-3))

    # 3) Ragged, TPU-unfriendly shape: full-extent blocks, no padding copy at all.
    A2 = jax.random.normal(k_a2, (10, 33), jnp.float32)
    x2 = jnp.linspace(-1.0, 1.0, 33, dtype=jnp.float32)
    y2 = mv_pallas(A2, x2)
    ref2 = jnp.dot(A2, x2, precision=jax.lax.Precision.HIGHEST)
    jax.block_until_ready(y2)
    assert y2.shape == (10,)
    assert bool(jnp.allclose(y2, ref2, atol=1e-3, rtol=1e-3))

    # 4) Ragged M with multiple tiles + bf16 A streamed in native dtype
    #    (exercises the masked last block and the in-kernel cast path).
    A3 = jax.random.normal(k_a3, (1000, 128), jnp.float32).astype(jnp.bfloat16)
    x3 = jax.random.normal(k_x, (128,), jnp.float32)
    y3 = mv_pallas(A3, x3, tile_m=256)
    ref3 = jnp.dot(A3.astype(jnp.float32), x3, precision=jax.lax.Precision.HIGHEST)
    jax.block_until_ready(y3)
    assert y3.shape == (1000,)
    assert y3.dtype == jnp.float32
    assert bool(jnp.allclose(y3, ref3, atol=1e-3, rtol=1e-3))

    print("KERNEL_OK")
</pallas_src>

<mosaic_0001>
module attributes {stable_mosaic.version = 11 : i64} {
  func.func @_mv_kernel(%arg0: i32, %arg1: memref<512x256xf32, #tpu.memory_space<vmem>>, %arg2: memref<1x256xf32, #tpu.memory_space<vmem>>, %arg3: memref<512x1xf32, #tpu.memory_space<vmem>>) attributes {dimension_semantics = [#tpu.dimension_semantics<parallel>], iteration_bounds = array<i64: 1>, scalar_prefetch = 0 : i64, scratch_operands = 0 : i64, tpu.core_type = #tpu.core_type<tc>, window_params = [{transform_indices = @transform_0, window_bounds = array<i64: 512, 256>}, {pipeline_mode = #tpu.pipeline_mode<synchronous>, transform_indices = @transform_1, window_bounds = array<i64: 1, 256>}, {transform_indices = @transform_2, window_bounds = array<i64: 512, 1>}]} {
    %c0 = arith.constant 0 : index
    %c0_0 = arith.constant 0 : index
    %0 = vector.load %arg1[%c0, %c0_0] : memref<512x256xf32, #tpu.memory_space<vmem>>, vector<512x256xf32>
    %c0_1 = arith.constant 0 : index
    %c0_2 = arith.constant 0 : index
    %1 = vector.load %arg2[%c0_1, %c0_2] : memref<1x256xf32, #tpu.memory_space<vmem>>, vector<1x256xf32>
    %2 = vector.broadcast %1 : vector<1x256xf32> to vector<512x256xf32>
    %3 = arith.mulf %0, %2 : vector<512x256xf32>
    %cst = arith.constant dense<0.000000e+00> : vector<512xf32>
    %4 = vector.multi_reduction <add>, %3, %cst [1] : vector<512x256xf32> to vector<512xf32>
    %5 = vector.shape_cast %4 : vector<512xf32> to vector<512x1xf32>
    %c0_3 = arith.constant 0 : index
    %c0_4 = arith.constant 0 : index
    %6 = vector.load %arg3[%c0_3, %c0_4] : memref<512x1xf32, #tpu.memory_space<vmem>>, vector<512x1xf32>
    tpu.vector_store %arg3[%c0_3, %c0_4], %5 {strides = array<i32>} : memref<512x1xf32, #tpu.memory_space<vmem>>, vector<512x1xf32>,
    return
  }
  func.func @transform_0(%arg0: i32) -> (i32, i32) {
    %c0_i32 = arith.constant 0 : i32
    %c0_i32_0 = arith.constant 0 : i32
    return %arg0, %c0_i32 : i32, i32
  }
  func.func @transform_1(%arg0: i32) -> (i32, i32) {
    %c0_i32 = arith.constant 0 : i32
    %c0_i32_0 = arith.constant 0 : i32
    %c0_i32_1 = arith.constant 0 : i32
    return %c0_i32, %c0_i32_0 : i32, i32
  }
  func.func @transform_2(%arg0: i32) -> (i32, i32) {
    %c0_i32 = arith.constant 0 : i32
    %c0_i32_0 = arith.constant 0 : i32
    return %arg0, %c0_i32 : i32, i32
  }
}

</mosaic_0001>

<llo_original>
// kernel: linear_least_squares_forward.1
$region0: #{linear_least_squares_forward.1}
  #allocation0 [shape = 'u32[]', space=smem, size = 0x4, offset = 0x4, fixed_abs, tag = 'smem constant byte address 0x4 - core index']
  #allocation1 [shape = 'u32[144,128]{1,0:T(1,128)}', space=vmem, size = 0x12000, scoped, tag = 'internal scratch']
  %s0 = inlined_call_operand.hbm [shape: f32[512,256], index: 0, kind: input, shape index: {}]
  %s1 = inlined_call_operand.hbm [shape: f32[1,256], index: 1, kind: input, shape index: {}]
  %s2 = inlined_call_operand.vmem [shape: f32[512,1], index: 2, kind: output, shape index: {}]
  %s3 = sld [smem:[#allocation0]]
  $region26: #{linear_least_squares_forward.1} parent=0
    _
  %s5 = ssub.s32 1, %s3
  %s6 = scalar_select 0, %s5, %s3
  $region1: #{linear_least_squares_forward.1} parent=0
    #allocation2 [shape = 'u8[524288]{0}', space=vmem, size = 0x80000, scoped, tag = 'input window, operand 0, single buffered']
    #allocation3 [shape = 's32[1]{0}', space=sflag, size = 0x4, scoped, tag = 'scoped memory for linear_least_squares_forward.1']
    #allocation4 [shape = 'u8[1024]{0}', space=vmem, size = 0x400, scoped, tag = 'input window, operand 1, single buffered']
    #allocation5 [shape = 's32[1]{0}', space=sflag, size = 0x4, scoped, tag = 'scoped memory for linear_least_squares_forward.1']
    %7 = vsyncpa [#allocation3], 0
    %8 = vsyncpa [#allocation5], 0
    // Predicated region
    $region2: #{linear_least_squares_forward.1} parent=1 // pred_check
      _
    $region3: #{linear_least_squares_forward.1} parent=1 // pred_check_branch
      %10 = sbr.rel (0) target = $region5
    $region4: #{linear_least_squares_forward.1} parent=1 // pred_region
      %s12 = ssub.s32 16384, 16384
      %13 = vsyncadd [#allocation3], %s12
      %s14 = sshll.u32 [#allocation2], 4
      %s15 = int_to_ptr.vmem [resolvable:$true] %s14
      %20 = dma.hbm_to_vmem [thread:$0]  %s0, 16384, %s15, [#allocation3], 256, 256, 16
    $region5: #{linear_least_squares_forward.1} parent=1 // pred_fallthru
      _
    // Predicated region
    $region6: #{linear_least_squares_forward.1} parent=1 // pred_check
      _
    $region7: #{linear_least_squares_forward.1} parent=1 // pred_check_branch
      %22 = sbr.rel (0) target = $region9
    $region8: #{linear_least_squares_forward.1} parent=1 // pred_region
      %s24 = ssub.s32 32, 32
      %25 = vsyncadd [#allocation5], %s24
      %s27 = sshll.u32 [#allocation4], 4
      %s28 = int_to_ptr.vmem [resolvable:$true] %s27
      %30 = dma.hbm_to_vmem [thread:$0]  %s1, 32, %s28, [#allocation5]
    $region9: #{linear_least_squares_forward.1} parent=1 // pred_fallthru
      _
    // Predicated region
    $region10: #{linear_least_squares_forward.1} parent=1 // pred_check
      _
    $region11: #{linear_least_squares_forward.1} parent=1 // pred_check_branch
      %32 = sbr.rel (0) target = $region13
    $region12: #{linear_least_squares_forward.1} parent=1 // pred_region
      %33 = dma.done [#allocation3], 16384
    $region13: #{linear_least_squares_forward.1} parent=1 // pred_fallthru
      _
    // Predicated region
    $region14: #{linear_least_squares_forward.1} parent=1 // pred_check
      _
    $region15: #{linear_least_squares_forward.1} parent=1 // pred_check_branch
      %35 = sbr.rel (0) target = $region17
    $region16: #{linear_least_squares_forward.1} parent=1 // pred_region
      %36 = dma.done [#allocation5], 32
    $region17: #{linear_least_squares_forward.1} parent=1 // pred_fallthru
      _
    %v37 = vld [vmem:[#allocation2] sm:$0xff]
    %v38 = vld [vmem:[#allocation2 + $0x8] sm:$0xff]
    %v39 = vld [vmem:[#allocation2 + $0x10] sm:$0xff]
    %v40 = vld [vmem:[#allocation2 + $0x18] sm:$0xff]
    %v41 = vld [vmem:[#allocation2 + $0x20] sm:$0xff]
    %v42 = vld [vmem:[#allocation2 + $0x28] sm:$0xff]
    %v43 = vld [vmem:[#allocation2 + $0x30] sm:$0xff]
    %v44 = vld [vmem:[#allocation2 + $0x38] sm:$0xff]
    %v45 = vld [vmem:[#allocation2 + $0x40] sm:$0xff]
    %v46 = vld [vmem:[#allocation2 + $0x48] sm:$0xff]
    %v47 = vld [vmem:[#allocation2 + $0x50] sm:$0xff]
    %v48 = vld [vmem:[#allocation2 + $0x58] sm:$0xff]
    %v49 = vld [vmem:[#allocation2 + $0x60] sm:$0xff]
    %v50 = vld [vmem:[#allocation2 + $0x68] sm:$0xff]
    %v51 = vld [vmem:[#allocation2 + $0x70] sm:$0xff]
    %v52 = vld [vmem:[#allocation2 + $0x78] sm:$0xff]
    %v53 = vld [vmem:[#allocation2 + $0x80] sm:$0xff]
    %v54 = vld [vmem:[#allocation2 + $0x88] sm:$0xff]
    %v55 = vld [vmem:[#allocation2 + $0x90] sm:$0xff]
    %v56 = vld [vmem:[#allocation2 + $0x98] sm:$0xff]
    %v57 = vld [vmem:[#allocation2 + $0xa0] sm:$0xff]
    %v58 = vld [vmem:[#allocation2 + $0xa8] sm:$0xff]
    %v59 = vld [vmem:[#allocation2 + $0xb0] sm:$0xff]
    %v60 = vld [vmem:[#allocation2 + $0xb8] sm:$0xff]
    %v61 = vld [vmem:[#allocation2 + $0xc0] sm:$0xff]
    %v62 = vld [vmem:[#allocation2 + $0xc8] sm:$0xff]
    %v63 = vld [vmem:[#allocation2 + $0xd0] sm:$0xff]
    %v64 = vld [vmem:[#allocation2 + $0xd8] sm:$0xff]
    %v65 = vld [vmem:[#allocation2 + $0xe0] sm:$0xff]
    %v66 = vld [vmem:[#allocation2 + $0xe8] sm:$0xff]
    %v67 = vld [vmem:[#allocation2 + $0xf0] sm:$0xff]
    %v68 = vld [vmem:[#allocation2 + $0xf8] sm:$0xff]
    %v69 = vld [vmem:[#allocation2 + $0x100] sm:$0xff]
    %v70 = vld [vmem:[#allocation2 + $0x108] sm:$0xff]
    %v71 = vld [vmem:[#allocation2 + $0x110] sm:$0xff]
    %v72 = vld [vmem:[#allocation2 + $0x118] sm:$0xff]
    %v73 = vld [vmem:[#allocation2 + $0x120] sm:$0xff]
    %v74 = vld [vmem:[#allocation2 + $0x128] sm:$0xff]
    %v75 = vld [vmem:[#allocation2 + $0x130] sm:$0xff]
    %v76 = vld [vmem:[#allocation2 + $0x138] sm:$0xff]
    %v77 = vld [vmem:[#allocation2 + $0x140] sm:$0xff]
    %v78 = vld [vmem:[#allocation2 + $0x148] sm:$0xff]
    %v79 = vld [vmem:[#allocation2 + $0x150] sm:$0xff]
    %v80 = vld [vmem:[#allocation2 + $0x158] sm:$0xff]
    %v81 = vld [vmem:[#allocation2 + $0x160] sm:$0xff]
    %v82 = vld [vmem:[#allocation2 + $0x168] sm:$0xff]
    %v83 = vld [vmem:[#allocation2 + $0x170] sm:$0xff]
    %v84 = vld [vmem:[#allocation2 + $0x178] sm:$0xff]
    %v85 = vld [vmem:[#allocation2 + $0x180] sm:$0xff]
    %v86 = vld [vmem:[#allocation2 + $0x188] sm:$0xff]
    %v87 = vld [vmem:[#allocation2 + $0x190] sm:$0xff]
    %v88 = vld [vmem:[#allocation2 + $0x198] sm:$0xff]
    %v89 = vld [vmem:[#allocation2 + $0x1a0] sm:$0xff]
    %v90 = vld [vmem:[#allocation2 + $0x1a8] sm:$0xff]
    %v91 = vld [vmem:[#allocation2 + $0x1b0] sm:$0xff]
    %v92 = vld [vmem:[#allocation2 + $0x1b8] sm:$0xff]
    %v93 = vld [vmem:[#allocation2 + $0x1c0] sm:$0xff]
    %v94 = vld [vmem:[#allocation2 + $0x1c8] sm:$0xff]
    %v95 = vld [vmem:[#allocation2 + $0x1d0] sm:$0xff]
    %v96 = vld [vmem:[#allocation2 + $0x1d8] sm:$0xff]
    %v97 = vld [vmem:[#allocation2 + $0x1e0] sm:$0xff]
    %v98 = vld [vmem:[#allocation2 + $0x1e8] sm:$0xff]
    %v99 = vld [vmem:[#allocation2 + $0x1f0] sm:$0xff]
    %v100 = vld [vmem:[#allocation2 + $0x1f8] sm:$0xff]
    %v101 = vld [vmem:[#allocation2 + $0x200] sm:$0xff]
    %v102 = vld [vmem:[#allocation2 + $0x208] sm:$0xff]
    %v103 = vld [vmem:[#allocation2 + $0x210] sm:$0xff]
    %v104 = vld [vmem:[#allocation2 + $0x218] sm:$0xff]
    %v105 = vld [vmem:[#allocation2 + $0x220] sm:$0xff]
    %v106 = vld [vmem:[#allocation2 + $0x228] sm:$0xff]
    %v107 = vld [vmem:[#allocation2 + $0x230] sm:$0xff]
    %v108 = vld [vmem:[#allocation2 + $0x238] sm:$0xff]
    %v109 = vld [vmem:[#allocation2 + $0x240] sm:$0xff]
    %v110 = vld [vmem:[#allocation2 + $0x248] sm:$0xff]
    %v111 = vld [vmem:[#allocation2 + $0x250] sm:$0xff]
    %v112 = vld [vmem:[#allocation2 + $0x258] sm:$0xff]
    %v113 = vld [vmem:[#allocation2 + $0x260] sm:$0xff]
    %v114 = vld [vmem:[#allocation2 + $0x268] sm:$0xff]
    %v115 = vld [vmem:[#allocation2 + $0x270] sm:$0xff]
    %v116 = vld [vmem:[#allocation2 + $0x278] sm:$0xff]
    %v117 = vld [vmem:[#allocation2 + $0x280] sm:$0xff]
    %v118 = vld [vmem:[#allocation2 + $0x288] sm:$0xff]
    %v119 = vld [vmem:[#allocation2 + $0x290] sm:$0xff]
    %v120 = vld [vmem:[#allocation2 + $0x298] sm:$0xff]
    %v121 = vld [vmem:[#allocation2 + $0x2a0] sm:$0xff]
    %v122 = vld [vmem:[#allocation2 + $0x2a8] sm:$0xff]
    %v123 = vld [vmem:[#allocation2 + $0x2b0] sm:$0xff]
    %v124 = vld [vmem:[#allocation2 + $0x2b8] sm:$0xff]
    %v125 = vld [vmem:[#allocation2 + $0x2c0] sm:$0xff]
    %v126 = vld [vmem:[#allocation2 + $0x2c8] sm:$0xff]
    %v127 = vld [vmem:[#allocation2 + $0x2d0] sm:$0xff]
    %v128 = vld [vmem:[#allocation2 + $0x2d8] sm:$0xff]
    %v129 = vld [vmem:[#allocation2 + $0x2e0] sm:$0xff]
    %v130 = vld [vmem:[#allocation2 + $0x2e8] sm:$0xff]
    %v131 = vld [vmem:[#allocation2 + $0x2f0] sm:$0xff]
    %v132 = vld [vmem:[#allocation2 + $0x2f8] sm:$0xff]
    %v133 = vld [vmem:[#allocation2 + $0x300] sm:$0xff]
    %v134 = vld [vmem:[#allocation2 + $0x308] sm:$0xff]
    %v135 = vld [vmem:[#allocation2 + $0x310] sm:$0xff]
    %v136 = vld [vmem:[#allocation2 + $0x318] sm:$0xff]
    %v137 = vld [vmem:[#allocation2 + $0x320] sm:$0xff]
    %v138 = vld [vmem:[#allocation2 + $0x328] sm:$0xff]
    %v139 = vld [vmem:[#allocation2 + $0x330] sm:$0xff]
    %v140 = vld [vmem:[#allocation2 + $0x338] sm:$0xff]
    %v141 = vld [vmem:[#allocation2 + $0x340] sm:$0xff]
    %v142 = vld [vmem:[#allocation2 + $0x348] sm:$0xff]
    %v143 = vld [vmem:[#allocation2 + $0x350] sm:$0xff]
    %v144 = vld [vmem:[#allocation2 + $0x358] sm:$0xff]
    %v145 = vld [vmem:[#allocation2 + $0x360] sm:$0xff]
    %v146 = vld [vmem:[#allocation2 + $0x368] sm:$0xff]
    %v147 = vld [vmem:[#allocation2 + $0x370] sm:$0xff]
    %v148 = vld [vmem:[#allocation2 + $0x378] sm:$0xff]
    %v149 = vld [vmem:[#allocation2 + $0x380] sm:$0xff]
    %v150 = vld [vmem:[#allocation2 + $0x388] sm:$0xff]
    %v151 = vld [vmem:[#allocation2 + $0x390] sm:$0xff]
    %v152 = vld [vmem:[#allocation2 + $0x398] sm:$0xff]
    %v153 = vld [vmem:[#allocation2 + $0x3a0] sm:$0xff]
    %v154 = vld [vmem:[#allocation2 + $0x3a8] sm:$0xff]
    %v155 = vld [vmem:[#allocation2 + $0x3b0] sm:$0xff]
    %v156 = vld [vmem:[#allocation2 + $0x3b8] sm:$0xff]
    %v157 = vld [vmem:[#allocation2 + $0x3c0] sm:$0xff]
    %v158 = vld [vmem:[#allocation2 + $0x3c8] sm:$0xff]
    %v159 = vld [vmem:[#allocation2 + $0x3d0] sm:$0xff]
    %v160 = vld [vmem:[#allocation2 + $0x3d8] sm:$0xff]
    %v161 = vld [vmem:[#allocation2 + $0x3e0] sm:$0xff]
    %v162 = vld [vmem:[#allocation2 + $0x3e8] sm:$0xff]
    %v163 = vld [vmem:[#allocation2 + $0x3f0] sm:$0xff]
    %v164 = vld [vmem:[#allocation2 + $0x3f8] sm:$0xff]
    %v165 = vld [vmem:[#allocation4] sm:$0x3]
    %v167 = vlaneseq
    %v168 = vshrl.u32 %v167, 7
    %v169 = vsub.s32 0, %v168
    %v170 = vrot.slane %v165, %v169
    %v171 = vlaneseq
    %v172 = vshrl.u32 %v171, 7
    %v173 = vsub.s32 1, %v172
    %v174 = vrot.slane %v165, %v173
    %v177 = vmul.f32 %v37, %v170
    %v178 = vmul.f32 %v38, %v174
    %v179 = vmul.f32 %v39, %v170
    %v180 = vmul.f32 %v40, %v174
    %v181 = vmul.f32 %v41, %v170
    %v182 = vmul.f32 %v42, %v174
    %v183 = vmul.f32 %v43, %v170
    %v184 = vmul.f32 %v44, %v174
    %v185 = vmul.f32 %v45, %v170
    %v186 = vmul.f32 %v46, %v174
    %v187 = vmul.f32 %v47, %v170
    %v188 = vmul.f32 %v48, %v174
    %v189 = vmul.f32 %v49, %v170
    %v190 = vmul.f32 %v50, %v174
    %v191 = vmul.f32 %v51, %v170
    %v192 = vmul.f32 %v52, %v174
    %v193 = vmul.f32 %v53, %v170
    %v194 = vmul.f32 %v54, %v174
    %v195 = vmul.f32 %v55, %v170
    %v196 = vmul.f32 %v56, %v174
    %v197 = vmul.f32 %v57, %v170
    %v198 = vmul.f32 %v58, %v174
    %v199 = vmul.f32 %v59, %v170
    %v200 = vmul.f32 %v60, %v174
    %v201 = vmul.f32 %v61, %v170
    %v202 = vmul.f32 %v62, %v174
    %v203 = vmul.f32 %v63, %v170
    %v204 = vmul.f32 %v64, %v174
    %v205 = vmul.f32 %v65, %v170
    %v206 = vmul.f32 %v66, %v174
    %v207 = vmul.f32 %v67, %v170
    %v208 = vmul.f32 %v68, %v174
    %v209 = vmul.f32 %v69, %v170
    %v210 = vmul.f32 %v70, %v174
    %v211 = vmul.f32 %v71, %v170
    %v212 = vmul.f32 %v72, %v174
    %v213 = vmul.f32 %v73, %v170
    %v214 = vmul.f32 %v74, %v174
    %v215 = vmul.f32 %v75, %v170
    %v216 = vmul.f32 %v76, %v174
    %v217 = vmul.f32 %v77, %v170
    %v218 = vmul.f32 %v78, %v174
    %v219 = vmul.f32 %v79, %v170
    %v220 = vmul.f32 %v80, %v174
    %v221 = vmul.f32 %v81, %v170
    %v222 = vmul.f32 %v82, %v174
    %v223 = vmul.f32 %v83, %v170
    %v224 = vmul.f32 %v84, %v174
    %v225 = vmul.f32 %v85, %v170
    %v226 = vmul.f32 %v86, %v174
    %v227 = vmul.f32 %v87, %v170
    %v228 = vmul.f32 %v88, %v174
    %v229 = vmul.f32 %v89, %v170
    %v230 = vmul.f32 %v90, %v174
    %v231 = vmul.f32 %v91, %v170
    %v232 = vmul.f32 %v92, %v174
    %v233 = vmul.f32 %v93, %v170
    %v234 = vmul.f32 %v94, %v174
    %v235 = vmul.f32 %v95, %v170
    %v236 = vmul.f32 %v96, %v174
    %v237 = vmul.f32 %v97, %v170
    %v238 = vmul.f32 %v98, %v174
    %v239 = vmul.f32 %v99, %v170
    %v240 = vmul.f32 %v100, %v174
    %v241 = vmul.f32 %v101, %v170
    %v242 = vmul.f32 %v102, %v174
    %v243 = vmul.f32 %v103, %v170
    %v244 = vmul.f32 %v104, %v174
    %v245 = vmul.f32 %v105, %v170
    %v246 = vmul.f32 %v106, %v174
    %v247 = vmul.f32 %v107, %v170
    %v248 = vmul.f32 %v108, %v174
    %v249 = vmul.f32 %v109, %v170
    %v250 = vmul.f32 %v110, %v174
    %v251 = vmul.f32 %v111, %v170
    %v252 = vmul.f32 %v112, %v174
    %v253 = vmul.f32 %v113, %v170
    %v254 = vmul.f32 %v114, %v174
    %v255 = vmul.f32 %v115, %v170
    %v256 = vmul.f32 %v116, %v174
    %v257 = vmul.f32 %v117, %v170
    %v258 = vmul.f32 %v118, %v174
    %v259 = vmul.f32 %v119, %v170
    %v260 = vmul.f32 %v120, %v174
    %v261 = vmul.f32 %v121, %v170
    %v262 = vmul.f32 %v122, %v174
    %v263 = vmul.f32 %v123, %v170
    %v264 = vmul.f32 %v124, %v174
    %v265 = vmul.f32 %v125, %v170
    %v266 = vmul.f32 %v126, %v174
    %v267 = vmul.f32 %v127, %v170
    %v268 = vmul.f32 %v128, %v174
    %v269 = vmul.f32 %v129, %v170
    %v270 = vmul.f32 %v130, %v174
    %v271 = vmul.f32 %v131, %v170
    %v272 = vmul.f32 %v132, %v174
    %v273 = vmul.f32 %v133, %v170
    %v274 = vmul.f32 %v134, %v174
    %v275 = vmul.f32 %v135, %v170
    %v276 = vmul.f32 %v136, %v174
    %v277 = vmul.f32 %v137, %v170
    %v278 = vmul.f32 %v138, %v174
    %v279 = vmul.f32 %v139, %v170
    %v280 = vmul.f32 %v140, %v174
    %v281 = vmul.f32 %v141, %v170
    %v282 = vmul.f32 %v142, %v174
    %v283 = vmul.f32 %v143, %v170
    %v284 = vmul.f32 %v144, %v174
    %v285 = vmul.f32 %v145, %v170
    %v286 = vmul.f32 %v146, %v174
    %v287 = vmul.f32 %v147, %v170
    %v288 = vmul.f32 %v148, %v174
    %v289 = vmul.f32 %v149, %v170
    %v290 = vmul.f32 %v150, %v174
    %v291 = vmul.f32 %v151, %v170
    %v292 = vmul.f32 %v152, %v174
    %v293 = vmul.f32 %v153, %v170
    %v294 = vmul.f32 %v154, %v174
    %v295 = vmul.f32 %v155, %v170
    %v296 = vmul.f32 %v156, %v174
    %v297 = vmul.f32 %v157, %v170
    %v298 = vmul.f32 %v158, %v174
    %v299 = vmul.f32 %v159, %v170
    %v300 = vmul.f32 %v160, %v174
    %v301 = vmul.f32 %v161, %v170
    %v302 = vmul.f32 %v162, %v174
    %v303 = vmul.f32 %v163, %v170
    %v304 = vmul.f32 %v164, %v174
    %v305 = vadd.f32 %v177, %v178
    %306 = vadd.xlane.f32.xlu0 %v305
    %v307 = vpop.xlane.xlu0 %306
    %v308 = vadd.f32 %v179, %v180
    %309 = vadd.xlane.f32.xlu0 %v308
    %v310 = vpop.xlane.xlu0 %309
    %v311 = vadd.f32 %v181, %v182
    %312 = vadd.xlane.f32.xlu0 %v311
    %v313 = vpop.xlane.xlu0 %312
    %v314 = vadd.f32 %v183, %v184
    %315 = vadd.xlane.f32.xlu0 %v314
    %v316 = vpop.xlane.xlu0 %315
    %v317 = vadd.f32 %v185, %v186
    %318 = vadd.xlane.f32.xlu0 %v317
    %v319 = vpop.xlane.xlu0 %318
    %v320 = vadd.f32 %v187, %v188
    %321 = vadd.xlane.f32.xlu0 %v320
    %v322 = vpop.xlane.xlu0 %321
    %v323 = vadd.f32 %v189, %v190
    %324 = vadd.xlane.f32.xlu0 %v323
    %v325 = vpop.xlane.xlu0 %324
    %v326 = vadd.f32 %v191, %v192
    %327 = vadd.xlane.f32.xlu0 %v326
    %v328 = vpop.xlane.xlu0 %327
    %v329 = vadd.f32 %v193, %v194
    %330 = vadd.xlane.f32.xlu0 %v329
    %v331 = vpop.xlane.xlu0 %330
    %v332 = vadd.f32 %v195, %v196
    %333 = vadd.xlane.f32.xlu0 %v332
    %v334 = vpop.xlane.xlu0 %333
    %v335 = vadd.f32 %v197, %v198
    %336 = vadd.xlane.f32.xlu0 %v335
    %v337 = vpop.xlane.xlu0 %336
    %v338 = vadd.f32 %v199, %v200
    %339 = vadd.xlane.f32.xlu0 %v338
    %v340 = vpop.xlane.xlu0 %339
    %v341 = vadd.f32 %v201, %v202
    %342 = vadd.xlane.f32.xlu0 %v341
    %v343 = vpop.xlane.xlu0 %342
    %v344 = vadd.f32 %v203, %v204
    %345 = vadd.xlane.f32.xlu0 %v344
    %v346 = vpop.xlane.xlu0 %345
    %v347 = vadd.f32 %v205, %v206
    %348 = vadd.xlane.f32.xlu0 %v347
    %v349 = vpop.xlane.xlu0 %348
    %v350 = vadd.f32 %v207, %v208
    %351 = vadd.xlane.f32.xlu0 %v350
    %v352 = vpop.xlane.xlu0 %351
    %v353 = vadd.f32 %v209, %v210
    %354 = vadd.xlane.f32.xlu0 %v353
    %v355 = vpop.xlane.xlu0 %354
    %v356 = vadd.f32 %v211, %v212
    %357 = vadd.xlane.f32.xlu0 %v356
    %v358 = vpop.xlane.xlu0 %357
    %v359 = vadd.f32 %v213, %v214
    %360 = vadd.xlane.f32.xlu0 %v359
    %v361 = vpop.xlane.xlu0 %360
    %v362 = vadd.f32 %v215, %v216
    %363 = vadd.xlane.f32.xlu0 %v362
    %v364 = vpop.xlane.xlu0 %363
    %v365 = vadd.f32 %v217, %v218
    %366 = vadd.xlane.f32.xlu0 %v365
    %v367 = vpop.xlane.xlu0 %366
    %v368 = vadd.f32 %v219, %v220
    %369 = vadd.xlane.f32.xlu0 %v368
    %v370 = vpop.xlane.xlu0 %369
    %v371 = vadd.f32 %v221, %v222
    %372 = vadd.xlane.f32.xlu0 %v371
    %v373 = vpop.xlane.xlu0 %372
    %v374 = vadd.f32 %v223, %v224
    %375 = vadd.xlane.f32.xlu0 %v374
    %v376 = vpop.xlane.xlu0 %375
    %v377 = vadd.f32 %v225, %v226
    %378 = vadd.xlane.f32.xlu0 %v377
    %v379 = vpop.xlane.xlu0 %378
    %v380 = vadd.f32 %v227, %v228
    %381 = vadd.xlane.f32.xlu0 %v380
    %v382 = vpop.xlane.xlu0 %381
    %v383 = vadd.f32 %v229, %v230
    %384 = vadd.xlane.f32.xlu0 %v383
    %v385 = vpop.xlane.xlu0 %384
    %v386 = vadd.f32 %v231, %v232
    %387 = vadd.xlane.f32.xlu0 %v386
    %v388 = vpop.xlane.xlu0 %387
    %v389 = vadd.f32 %v233, %v234
    %390 = vadd.xlane.f32.xlu0 %v389
    %v391 = vpop.xlane.xlu0 %390
    %v392 = vadd.f32 %v235, %v236
    %393 = vadd.xlane.f32.xlu0 %v392
    %v394 = vpop.xlane.xlu0 %393
    %v395 = vadd.f32 %v237, %v238
    %396 = vadd.xlane.f32.xlu0 %v395
    %v397 = vpop.xlane.xlu0 %396
    %v398 = vadd.f32 %v239, %v240
    %399 = vadd.xlane.f32.xlu0 %v398
    %v400 = vpop.xlane.xlu0 %399
    %v401 = vadd.f32 %v241, %v242
    %402 = vadd.xlane.f32.xlu0 %v401
    %v403 = vpop.xlane.xlu0 %402
    %v404 = vadd.f32 %v243, %v244
    %405 = vadd.xlane.f32.xlu0 %v404
    %v406 = vpop.xlane.xlu0 %405
    %v407 = vadd.f32 %v245, %v246
    %408 = vadd.xlane.f32.xlu0 %v407
    %v409 = vpop.xlane.xlu0 %408
    %v410 = vadd.f32 %v247, %v248
    %411 = vadd.xlane.f32.xlu0 %v410
    %v412 = vpop.xlane.xlu0 %411
    %v413 = vadd.f32 %v249, %v250
    %414 = vadd.xlane.f32.xlu0 %v413
    %v415 = vpop.xlane.xlu0 %414
    %v416 = vadd.f32 %v251, %v252
    %417 = vadd.xlane.f32.xlu0 %v416
    %v418 = vpop.xlane.xlu0 %417
    %v419 = vadd.f32 %v253, %v254
    %420 = vadd.xlane.f32.xlu0 %v419
    %v421 = vpop.xlane.xlu0 %420
    %v422 = vadd.f32 %v255, %v256
    %423 = vadd.xlane.f32.xlu0 %v422
    %v424 = vpop.xlane.xlu0 %423
    %v425 = vadd.f32 %v257, %v258
    %426 = vadd.xlane.f32.xlu0 %v425
    %v427 = vpop.xlane.xlu0 %426
    %v428 = vadd.f32 %v259, %v260
    %429 = vadd.xlane.f32.xlu0 %v428
    %v430 = vpop.xlane.xlu0 %429
    %v431 = vadd.f32 %v261, %v262
    %432 = vadd.xlane.f32.xlu0 %v431
    %v433 = vpop.xlane.xlu0 %432
    %v434 = vadd.f32 %v263, %v264
    %435 = vadd.xlane.f32.xlu0 %v434
    %v436 = vpop.xlane.xlu0 %435
    %v437 = vadd.f32 %v265, %v266
    %438 = vadd.xlane.f32.xlu0 %v437
    %v439 = vpop.xlane.xlu0 %438
    %v440 = vadd.f32 %v267, %v268
    %441 = vadd.xlane.f32.xlu0 %v440
    %v442 = vpop.xlane.xlu0 %441
    %v443 = vadd.f32 %v269, %v270
    %444 = vadd.xlane.f32.xlu0 %v443
    %v445 = vpop.xlane.xlu0 %444
    %v446 = vadd.f32 %v271, %v272
    %447 = vadd.xlane.f32.xlu0 %v446
    %v448 = vpop.xlane.xlu0 %447
    %v449 = vadd.f32 %v273, %v274
    %450 = vadd.xlane.f32.xlu0 %v449
    %v451 = vpop.xlane.xlu0 %450
    %v452 = vadd.f32 %v275, %v276
    %453 = vadd.xlane.f32.xlu0 %v452
    %v454 = vpop.xlane.xlu0 %453
    %v455 = vadd.f32 %v277, %v278
    %456 = vadd.xlane.f32.xlu0 %v455
    %v457 = vpop.xlane.xlu0 %456
    %v458 = vadd.f32 %v279, %v280
    %459 = vadd.xlane.f32.xlu0 %v458
    %v460 = vpop.xlane.xlu0 %459
    %v461 = vadd.f32 %v281, %v282
    %462 = vadd.xlane.f32.xlu0 %v461
    %v463 = vpop.xlane.xlu0 %462
    %v464 = vadd.f32 %v283, %v284
    %465 = vadd.xlane.f32.xlu0 %v464
    %v466 = vpop.xlane.xlu0 %465
    %v467 = vadd.f32 %v285, %v286
    %468 = vadd.xlane.f32.xlu0 %v467
    %v469 = vpop.xlane.xlu0 %468
    %v470 = vadd.f32 %v287, %v288
    %471 = vadd.xlane.f32.xlu0 %v470
    %v472 = vpop.xlane.xlu0 %471
    %v473 = vadd.f32 %v289, %v290
    %474 = vadd.xlane.f32.xlu0 %v473
    %v475 = vpop.xlane.xlu0 %474
    %v476 = vadd.f32 %v291, %v292
    %477 = vadd.xlane.f32.xlu0 %v476
    %v478 = vpop.xlane.xlu0 %477
    %v479 = vadd.f32 %v293, %v294
    %480 = vadd.xlane.f32.xlu0 %v479
    %v481 = vpop.xlane.xlu0 %480
    %v482 = vadd.f32 %v295, %v296
    %483 = vadd.xlane.f32.xlu0 %v482
    %v484 = vpop.xlane.xlu0 %483
    %v485 = vadd.f32 %v297, %v298
    %486 = vadd.xlane.f32.xlu0 %v485
    %v487 = vpop.xlane.xlu0 %486
    %v488 = vadd.f32 %v299, %v300
    %489 = vadd.xlane.f32.xlu0 %v488
    %v490 = vpop.xlane.xlu0 %489
    %v491 = vadd.f32 %v301, %v302
    %492 = vadd.xlane.f32.xlu0 %v491
    %v493 = vpop.xlane.xlu0 %492
    %v494 = vadd.f32 %v303, %v304
    %495 = vadd.xlane.f32.xlu0 %v494
    %v496 = vpop.xlane.xlu0 %495
    %vm497 = vcmask 7168
    %498 = vst.msk [vmem:[%s2] sm:$0xff] %vm497, %v307
    %499 = vst.msk [vmem:[%s2 + $0x8] sm:$0xff] %vm497, %v310
    %500 = vst.msk [vmem:[%s2 + $0x10] sm:$0xff] %vm497, %v313
    %501 = vst.msk [vmem:[%s2 + $0x18] sm:$0xff] %vm497, %v316
    %502 = vst.msk [vmem:[%s2 + $0x20] sm:$0xff] %vm497, %v319
    %503 = vst.msk [vmem:[%s2 + $0x28] sm:$0xff] %vm497, %v322
    %504 = vst.msk [vmem:[%s2 + $0x30] sm:$0xff] %vm497, %v325
    %505 = vst.msk [vmem:[%s2 + $0x38] sm:$0xff] %vm497, %v328
    %506 = vst.msk [vmem:[%s2 + $0x40] sm:$0xff] %vm497, %v331
    %507 = vst.msk [vmem:[%s2 + $0x48] sm:$0xff] %vm497, %v334
    %508 = vst.msk [vmem:[%s2 + $0x50] sm:$0xff] %vm497, %v337
    %509 = vst.msk [vmem:[%s2 + $0x58] sm:$0xff] %vm497, %v340
    %510 = vst.msk [vmem:[%s2 + $0x60] sm:$0xff] %vm497, %v343
    %511 = vst.msk [vmem:[%s2 + $0x68] sm:$0xff] %vm497, %v346
    %512 = vst.msk [vmem:[%s2 + $0x70] sm:$0xff] %vm497, %v349
    %513 = vst.msk [vmem:[%s2 + $0x78] sm:$0xff] %vm497, %v352
    %514 = vst.msk [vmem:[%s2 + $0x80] sm:$0xff] %vm497, %v355
    %515 = vst.msk [vmem:[%s2 + $0x88] sm:$0xff] %vm497, %v358
    %516 = vst.msk [vmem:[%s2 + $0x90] sm:$0xff] %vm497, %v361
    %517 = vst.msk [vmem:[%s2 + $0x98] sm:$0xff] %vm497, %v364
    %518 = vst.msk [vmem:[%s2 + $0xa0] sm:$0xff] %vm497, %v367
    %519 = vst.msk [vmem:[%s2 + $0xa8] sm:$0xff] %vm497, %v370
    %520 = vst.msk [vmem:[%s2 + $0xb0] sm:$0xff] %vm497, %v373
    %521 = vst.msk [vmem:[%s2 + $0xb8] sm:$0xff] %vm497, %v376
    %522 = vst.msk [vmem:[%s2 + $0xc0] sm:$0xff] %vm497, %v379
    %523 = vst.msk [vmem:[%s2 + $0xc8] sm:$0xff] %vm497, %v382
    %524 = vst.msk [vmem:[%s2 + $0xd0] sm:$0xff] %vm497, %v385
    %525 = vst.msk [vmem:[%s2 + $0xd8] sm:$0xff] %vm497, %v388
    %526 = vst.msk [vmem:[%s2 + $0xe0] sm:$0xff] %vm497, %v391
    %527 = vst.msk [vmem:[%s2 + $0xe8] sm:$0xff] %vm497, %v394
    %528 = vst.msk [vmem:[%s2 + $0xf0] sm:$0xff] %vm497, %v397
    %529 = vst.msk [vmem:[%s2 + $0xf8] sm:$0xff] %vm497, %v400
    %530 = vst.msk [vmem:[%s2 + $0x100] sm:$0xff] %vm497, %v403
    %531 = vst.msk [vmem:[%s2 + $0x108] sm:$0xff] %vm497, %v406
    %532 = vst.msk [vmem:[%s2 + $0x110] sm:$0xff] %vm497, %v409
    %533 = vst.msk [vmem:[%s2 + $0x118] sm:$0xff] %vm497, %v412
    %534 = vst.msk [vmem:[%s2 + $0x120] sm:$0xff] %vm497, %v415
    %535 = vst.msk [vmem:[%s2 + $0x128] sm:$0xff] %vm497, %v418
    %536 = vst.msk [vmem:[%s2 + $0x130] sm:$0xff] %vm497, %v421
    %537 = vst.msk [vmem:[%s2 + $0x138] sm:$0xff] %vm497, %v424
    %538 = vst.msk [vmem:[%s2 + $0x140] sm:$0xff] %vm497, %v427
    %539 = vst.msk [vmem:[%s2 + $0x148] sm:$0xff] %vm497, %v430
    %540 = vst.msk [vmem:[%s2 + $0x150] sm:$0xff] %vm497, %v433
    %541 = vst.msk [vmem:[%s2 + $0x158] sm:$0xff] %vm497, %v436
    %542 = vst.msk [vmem:[%s2 + $0x160] sm:$0xff] %vm497, %v439
    %543 = vst.msk [vmem:[%s2 + $0x168] sm:$0xff] %vm497, %v442
    %544 = vst.msk [vmem:[%s2 + $0x170] sm:$0xff] %vm497, %v445
    %545 = vst.msk [vmem:[%s2 + $0x178] sm:$0xff] %vm497, %v448
    %546 = vst.msk [vmem:[%s2 + $0x180] sm:$0xff] %vm497, %v451
    %547 = vst.msk [vmem:[%s2 + $0x188] sm:$0xff] %vm497, %v454
    %548 = vst.msk [vmem:[%s2 + $0x190] sm:$0xff] %vm497, %v457
    %549 = vst.msk [vmem:[%s2 + $0x198] sm:$0xff] %vm497, %v460
    %550 = vst.msk [vmem:[%s2 + $0x1a0] sm:$0xff] %vm497, %v463
    %551 = vst.msk [vmem:[%s2 + $0x1a8] sm:$0xff] %vm497, %v466
    %552 = vst.msk [vmem:[%s2 + $0x1b0] sm:$0xff] %vm497, %v469
    %553 = vst.msk [vmem:[%s2 + $0x1b8] sm:$0xff] %vm497, %v472
    %554 = vst.msk [vmem:[%s2 + $0x1c0] sm:$0xff] %vm497, %v475
    %555 = vst.msk [vmem:[%s2 + $0x1c8] sm:$0xff] %vm497, %v478
    %556 = vst.msk [vmem:[%s2 + $0x1d0] sm:$0xff] %vm497, %v481
    %557 = vst.msk [vmem:[%s2 + $0x1d8] sm:$0xff] %vm497, %v484
    %558 = vst.msk [vmem:[%s2 + $0x1e0] sm:$0xff] %vm497, %v487
    %559 = vst.msk [vmem:[%s2 + $0x1e8] sm:$0xff] %vm497, %v490
    %560 = vst.msk [vmem:[%s2 + $0x1f0] sm:$0xff] %vm497, %v493
    %561 = vst.msk [vmem:[%s2 + $0x1f8] sm:$0xff] %vm497, %v496
    // Predicated region
    $region18: #{linear_least_squares_forward.1} parent=1 // pred_check
      _
    $region19: #{linear_least_squares_forward.1} parent=1 // pred_check_branch
      %563 = sbr.rel (0) target = $region21
    $region20: #{linear_least_squares_forward.1} parent=1 // pred_region
      _
    $region21: #{linear_least_squares_forward.1} parent=1 // pred_fallthru
      _
    // Predicated region
    $region22: #{linear_least_squares_forward.1} parent=1 // pred_check
      _
    $region23: #{linear_least_squares_forward.1} parent=1 // pred_check_branch
      %565 = sbr.rel (0) target = $region25
    $region24: #{linear_least_squares_forward.1} parent=1 // pred_region
      _
    $region25: #{linear_least_squares_forward.1} parent=1 // pred_fallthru
      _
    %566 = vsyncpa [#allocation3], 1
    %567 = vsyncpa [#allocation5], 1

</llo_original>
